<compile_context>
chip_gen: v5e
topology: v5e:2x2
jax: 0.10.0
libtpu: 0.0.40
codegen_flags: <defaults>
</compile_context>

<pallas_src>
import jax
import jax.numpy as jnp
from jax import lax
from jax.experimental import pallas as pl
from jax.experimental.pallas import tpu as pltpu

IN_F, H1, H2, OUT_F = 7, 128, 32, 1


def _round_up(n, m):
    return ((n + m - 1) // m) * m


def _mlp_kernel(x_ref, w1_ref, w2_ref, b2_ref, w3_ref, b3_ref, o_ref):
    # x_ref: (tb, 8) bf16, column 7 is the ones column (b1 folded into w1).
    x8 = x_ref[...]

    # fc1 (+b1 via the ones column) : contract (128,8) with (tb,8) on their
    # last dims -> (128, tb), f32 accumulation on the MXU.  No explicit
    # transpose is materialized; the MXU consumes the RHS transposed.
    h1 = lax.dot_general(
        w1_ref[...], x8,
        dimension_numbers=(((1,), (1,)), ((), ())),
        preferred_element_type=jnp.float32)
    h1 = jnp.maximum(h1, 0.0)                                   # ReLU in f32

    # fc2 + bias + ReLU : (32,128) @ (128,tb) -> (32,tb), bf16 operands / f32 acc.
    h2 = jnp.dot(w2_ref[...], h1.astype(jnp.bfloat16),
                 preferred_element_type=jnp.float32)
    h2 = jnp.maximum(h2 + b2_ref[...], 0.0)                     # f32 VPU math

    # fc3 (32 -> 1) on VPU/XLU: broadcast-multiply + sublane reduction.
    h3 = jnp.sum(h2 * w3_ref[...], axis=0, keepdims=True) + b3_ref[...]  # (1, tb)

    # Sigmoid: exp on the EUP, approximate reciprocal also on the EUP (free slot).
    o_ref[...] = pl.reciprocal(1.0 + jnp.exp(-h3), approx=True)


def _pack_params(p):
    """PyTorch-layout params -> kernel-layout operands (cheap, fuses under jit)."""
    # fc1 weight with b1 folded in as an 8th input column, cast once to bf16.
    w1p = jnp.concatenate([p["w1"], p["b1"][:, None]], axis=1).astype(jnp.bfloat16)  # (128, 8)
    w2 = p["w2"].astype(jnp.bfloat16)                                                # (32, 128)
    b2 = p["b2"].reshape(H2, 1).astype(jnp.float32)                                  # (32, 1)
    w3 = p["w3"].reshape(H2, OUT_F).astype(jnp.float32)                              # (32, 1)
    b3 = p["b3"].reshape(1, 1).astype(jnp.float32)                                   # (1, 1)
    return w1p, w2, b2, w3, b3


def salary_predictor_forward(x, params, *, tb=8192):
    """x: (B, 7) float32. params: PyTorch-layout dict (see init_params). Returns (B, 1) f32."""
    B = x.shape[0]
    w1p, w2, b2, w3, b3 = _pack_params(params)

    # Batch lives on the lane axis: pad only to the nearest 128 lanes, and keep
    # the grid at >=2 steps when possible so v7x's two TensorCores both get work.
    Bp128 = _round_up(B, 128)
    tb = _round_up(min(max(tb, 128), Bp128), 128)
    if Bp128 >= 2 * 128:
        tb = min(tb, _round_up(pl.cdiv(Bp128, 2), 128))
    Bp = _round_up(Bp128, tb)
    grid = (Bp // tb,)

    # One fused pad/cast pass over x (no wrapper-side transpose, no HBM round
    # trip): append the ones column for the bias fold, cast to bf16, pad rows.
    ones = jnp.ones((B, 1), x.dtype)
    x8 = jnp.concatenate([x, ones], axis=1).astype(jnp.bfloat16)   # (B, 8)
    x8 = jnp.pad(x8, ((0, Bp - B), (0, 0)))                        # (Bp, 8)

    # Weights / biases: full-array blocks with constant index maps -> DMA'd
    # once, VMEM-resident across all grid steps (total ~12 KiB).
    resident = lambda a: pl.BlockSpec(a.shape, lambda i: (0, 0))

    outT = pl.pallas_call(
        _mlp_kernel,
        out_shape=jax.ShapeDtypeStruct((OUT_F, Bp), jnp.float32),
        grid=grid,
        in_specs=[
            pl.BlockSpec((tb, IN_F + 1), lambda i: (i, 0)),        # x tile, pipelined
            resident(w1p), resident(w2), resident(b2),
            resident(w3), resident(b3),
        ],
        out_specs=pl.BlockSpec((OUT_F, tb), lambda i: (0, i)),     # lane-dense store
        compiler_params=pltpu.CompilerParams(
            dimension_semantics=("parallel",),                     # dual-TC on v7x
            vmem_limit_bytes=32 << 20,                             # covers v5e's 16 MiB default
        ),
    )(x8, w1p, w2, b2, w3, b3)

    return outT[:, :B].T                                           # (B, 1)


def init_params(key):
    """Deterministic init mirroring nn.Linear's U(-1/sqrt(fan_in), 1/sqrt(fan_in)).

    Weights stored (out, in) — exactly PyTorch's layout.
    """
    ks = jax.random.split(key, 6)

    def linear(kw, kb, fan_in, fan_out):
        bound = 1.0 / jnp.sqrt(fan_in)
        w = jax.random.uniform(kw, (fan_out, fan_in), jnp.float32, -bound, bound)
        b = jax.random.uniform(kb, (fan_out,), jnp.float32, -bound, bound)
        return w, b

    w1, b1 = linear(ks[0], ks[1], IN_F, H1)
    w2, b2 = linear(ks[2], ks[3], H1, H2)
    w3, b3 = linear(ks[4], ks[5], H2, OUT_F)
    return {"w1": w1, "b1": b1, "w2": w2, "b2": b2, "w3": w3, "b3": b3}


def reference_forward(x, p):
    """Pure-JAX f32 reference with PyTorch semantics."""
    h = jnp.maximum(x @ p["w1"].T + p["b1"], 0.0)
    h = jnp.maximum(h @ p["w2"].T + p["b2"], 0.0)
    return jax.nn.sigmoid(h @ p["w3"].T + p["b3"])


if __name__ == "__main__":
    key = jax.random.PRNGKey(0)
    k_param, k_x1, k_x2 = jax.random.split(key, 3)
    params = init_params(k_param)

    # Small batch (single grid step).
    B1 = 8
    x1 = jax.random.normal(k_x1, (B1, IN_F), dtype=jnp.float32)
    out1 = jax.block_until_ready(salary_predictor_forward(x1, params))
    ref1 = reference_forward(x1, params)
    assert out1.shape == (B1, OUT_F)
    # bf16 MXU operands + approx reciprocal -> relaxed tolerance vs f32 reference.
    assert jnp.allclose(out1, ref1, atol=2e-2, rtol=2e-2), "mismatch vs JAX reference (B=8)"

    # Batch that exercises lane padding and a >=2-step grid.
    B2 = 300
    x2 = jax.random.normal(k_x2, (B2, IN_F), dtype=jnp.float32)
    out2 = jax.block_until_ready(salary_predictor_forward(x2, params))
    ref2 = reference_forward(x2, params)
    assert out2.shape == (B2, OUT_F)
    assert jnp.allclose(out2, ref2, atol=2e-2, rtol=2e-2), "mismatch vs JAX reference (B=300)"

    print("KERNEL_OK")
</pallas_src>

<mosaic_0001>
module attributes {stable_mosaic.version = 11 : i64} {
  func.func @_mlp_kernel(%arg0: i32, %arg1: memref<128x8xbf16, #tpu.memory_space<vmem>>, %arg2: memref<128x8xbf16, #tpu.memory_space<vmem>>, %arg3: memref<32x128xbf16, #tpu.memory_space<vmem>>, %arg4: memref<32x1xf32, #tpu.memory_space<vmem>>, %arg5: memref<32x1xf32, #tpu.memory_space<vmem>>, %arg6: memref<1x1xf32, #tpu.memory_space<vmem>>, %arg7: memref<1x128xf32, #tpu.memory_space<vmem>>) attributes {dimension_semantics = [#tpu.dimension_semantics<parallel>], iteration_bounds = array<i64: 1>, scalar_prefetch = 0 : i64, scratch_operands = 0 : i64, tpu.core_type = #tpu.core_type<tc>, window_params = [{transform_indices = @transform_0, window_bounds = array<i64: 128, 8>}, {pipeline_mode = #tpu.pipeline_mode<synchronous>, transform_indices = @transform_1, window_bounds = array<i64: 128, 8>}, {pipeline_mode = #tpu.pipeline_mode<synchronous>, transform_indices = @transform_2, window_bounds = array<i64: 32, 128>}, {pipeline_mode = #tpu.pipeline_mode<synchronous>, transform_indices = @transform_3, window_bounds = array<i64: 32, 1>}, {pipeline_mode = #tpu.pipeline_mode<synchronous>, transform_indices = @transform_4, window_bounds = array<i64: 32, 1>}, {pipeline_mode = #tpu.pipeline_mode<synchronous>, transform_indices = @transform_5, window_bounds = array<i64: 1, 1>}, {transform_indices = @transform_6, window_bounds = array<i64: 1, 128>}]} {
    %c0 = arith.constant 0 : index
    %c0_0 = arith.constant 0 : index
    %0 = vector.load %arg1[%c0, %c0_0] : memref<128x8xbf16, #tpu.memory_space<vmem>>, vector<128x8xbf16>
    %c0_1 = arith.constant 0 : index
    %c0_2 = arith.constant 0 : index
    %1 = vector.load %arg2[%c0_1, %c0_2] : memref<128x8xbf16, #tpu.memory_space<vmem>>, vector<128x8xbf16>
    %cst = arith.constant dense<0.000000e+00> : vector<128x128xf32>
    %2 = tpu.matmul %1, %0, %cst {dimension_numbers = #tpu.dot_dimension_numbers<[1], [1], [0], [0], [0, 0, 1, 0], [], []>} : vector<128x8xbf16>, vector<128x8xbf16>, vector<128x128xf32> -> vector<128x128xf32>
    %cst_3 = arith.constant 0.000000e+00 : f32
    %3 = vector.broadcast %cst_3 : f32 to vector<128x128xf32>
    %4 = arith.maximumf %2, %3 : vector<128x128xf32>
    %c0_4 = arith.constant 0 : index
    %c0_5 = arith.constant 0 : index
    %5 = vector.load %arg3[%c0_4, %c0_5] : memref<32x128xbf16, #tpu.memory_space<vmem>>, vector<32x128xbf16>
    %6 = arith.truncf %4 : vector<128x128xf32> to vector<128x128xbf16>
    %cst_6 = arith.constant dense<0.000000e+00> : vector<32x128xf32>
    %7 = tpu.matmul %5, %6, %cst_6 {dimension_numbers = #tpu.dot_dimension_numbers<[1], [0], [0], [1], [0, 0, 1, 1], [], []>} : vector<32x128xbf16>, vector<128x128xbf16>, vector<32x128xf32> -> vector<32x128xf32>
    %c0_7 = arith.constant 0 : index
    %c0_8 = arith.constant 0 : index
    %8 = vector.load %arg4[%c0_7, %c0_8] : memref<32x1xf32, #tpu.memory_space<vmem>>, vector<32x1xf32>
    %9 = vector.broadcast %8 : vector<32x1xf32> to vector<32x128xf32>
    %10 = arith.addf %7, %9 : vector<32x128xf32>
    %cst_9 = arith.constant 0.000000e+00 : f32
    %11 = vector.broadcast %cst_9 : f32 to vector<32x128xf32>
    %12 = arith.maximumf %10, %11 : vector<32x128xf32>
    %c0_10 = arith.constant 0 : index
    %c0_11 = arith.constant 0 : index
    %13 = vector.load %arg5[%c0_10, %c0_11] : memref<32x1xf32, #tpu.memory_space<vmem>>, vector<32x1xf32>
    %14 = vector.broadcast %13 : vector<32x1xf32> to vector<32x128xf32>
    %15 = arith.mulf %12, %14 : vector<32x128xf32>
    %cst_12 = arith.constant dense<0.000000e+00> : vector<128xf32>
    %16 = vector.multi_reduction <add>, %15, %cst_12 [0] : vector<32x128xf32> to vector<128xf32>
    %17 = vector.shape_cast %16 : vector<128xf32> to vector<1x128xf32>
    %c0_13 = arith.constant 0 : index
    %c0_14 = arith.constant 0 : index
    %18 = vector.load %arg6[%c0_13, %c0_14] : memref<1x1xf32, #tpu.memory_space<vmem>>, vector<1x1xf32>
    %19 = vector.broadcast %18 : vector<1x1xf32> to vector<1x128xf32>
    %20 = arith.addf %17, %19 : vector<1x128xf32>
    %cst_15 = arith.constant 0.000000e+00 : f32
    %21 = vector.broadcast %cst_15 : f32 to vector<1x128xf32>
    %22 = arith.subf %21, %20 : vector<1x128xf32>
    %23 = math.exp %22 : vector<1x128xf32>
    %cst_16 = arith.constant 1.000000e+00 : f32
    %24 = vector.broadcast %cst_16 : f32 to vector<1x128xf32>
    %25 = arith.addf %24, %23 : vector<1x128xf32>
    %26 = tpu.reciprocal %25 {approx = true} : vector<1x128xf32> -> vector<1x128xf32>
    %c0_17 = arith.constant 0 : index
    %c0_18 = arith.constant 0 : index
    %27 = vector.load %arg7[%c0_17, %c0_18] : memref<1x128xf32, #tpu.memory_space<vmem>>, vector<1x128xf32>
    tpu.vector_store %arg7[%c0_17, %c0_18], %26 {strides = array<i32>} : memref<1x128xf32, #tpu.memory_space<vmem>>, vector<1x128xf32>,
    return
  }
  func.func @transform_0(%arg0: i32) -> (i32, i32) {
    %c0_i32 = arith.constant 0 : i32
    %c0_i32_0 = arith.constant 0 : i32
    return %arg0, %c0_i32 : i32, i32
  }
  func.func @transform_1(%arg0: i32) -> (i32, i32) {
    %c0_i32 = arith.constant 0 : i32
    %c0_i32_0 = arith.constant 0 : i32
    %c0_i32_1 = arith.constant 0 : i32
    return %c0_i32, %c0_i32_0 : i32, i32
  }
  func.func @transform_2(%arg0: i32) -> (i32, i32) {
    %c0_i32 = arith.constant 0 : i32
    %c0_i32_0 = arith.constant 0 : i32
    %c0_i32_1 = arith.constant 0 : i32
    return %c0_i32, %c0_i32_0 : i32, i32
  }
  func.func @transform_3(%arg0: i32) -> (i32, i32) {
    %c0_i32 = arith.constant 0 : i32
    %c0_i32_0 = arith.constant 0 : i32
    %c0_i32_1 = arith.constant 0 : i32
    return %c0_i32, %c0_i32_0 : i32, i32
  }
  func.func @transform_4(%arg0: i32) -> (i32, i32) {
    %c0_i32 = arith.constant 0 : i32
    %c0_i32_0 = arith.constant 0 : i32
    %c0_i32_1 = arith.constant 0 : i32
    return %c0_i32, %c0_i32_0 : i32, i32
  }
  func.func @transform_5(%arg0: i32) -> (i32, i32) {
    %c0_i32 = arith.constant 0 : i32
    %c0_i32_0 = arith.constant 0 : i32
    %c0_i32_1 = arith.constant 0 : i32
    return %c0_i32, %c0_i32_0 : i32, i32
  }
  func.func @transform_6(%arg0: i32) -> (i32, i32) {
    %c0_i32 = arith.constant 0 : i32
    %c0_i32_0 = arith.constant 0 : i32
    return %c0_i32, %arg0 : i32, i32
  }
}

</mosaic_0001>

<llo_original>
// kernel: tpu_custom_call.1
$region0: #{tpu_custom_call.1}
  #allocation0 [shape = 'u32[]', space=smem, size = 0x4, offset = 0x4, fixed_abs, tag = 'smem constant byte address 0x4 - core index']
  #allocation1 [shape = 'u32[72,128]{1,0:T(1,128)}', space=vmem, size = 0x9000, scoped, tag = 'internal scratch']
  #allocation2 [shape = 'f32[1,1]{1,0:T(1,128)S(1)}', space=vmem, size = 0x200, scoped, tag = 'scoped memory for tpu_custom_call.1']
  %s0 = inlined_call_operand.vmem [shape: bf16[128,8], index: 0, kind: input, shape index: {}]
  %s1 = inlined_call_operand.vmem [shape: bf16[128,8], index: 1, kind: input, shape index: {}]
  %s2 = inlined_call_operand.vmem [shape: bf16[32,128], index: 2, kind: input, shape index: {}]
  %s3 = inlined_call_operand.vmem [shape: f32[32,1], index: 3, kind: input, shape index: {}]
  %s4 = inlined_call_operand.vmem [shape: f32[32,1], index: 4, kind: input, shape index: {}]
  %s5 = inlined_call_operand.<no memory space> [shape: f32[1,1], index: 5, kind: input, shape index: {}]
  %s6 = inlined_call_operand.hbm [shape: f32[1,128], index: 6, kind: output, shape index: {}]
  %s7 = sld [smem:[#allocation0]]
  $region34: #{tpu_custom_call.1} parent=0
    _
  %s9 = ssub.s32 1, %s7
  %s10 = scalar_select 0, %s9, %s7
  %v11 = vstv %s5
  %12 = vst [vmem:[#allocation2] sm:$0x1] %v11
  $region1: #{tpu_custom_call.1} parent=0
    #allocation3 [shape = 'u8[512]{0}', space=vmem, size = 0x400, scoped, tag = 'output window, operand 0, single buffered']
    #allocation4 [shape = 's32[1]{0}', space=sflag, size = 0x4, scoped, tag = 'scoped memory for tpu_custom_call.1']
    %13 = vsyncpa [#allocation4], 0
    // Predicated region
    $region2: #{tpu_custom_call.1} parent=1 // pred_check
      _
    $region3: #{tpu_custom_call.1} parent=1 // pred_check_branch
      %15 = sbr.rel (0) target = $region5
    $region4: #{tpu_custom_call.1} parent=1 // pred_region
      _
    $region5: #{tpu_custom_call.1} parent=1 // pred_fallthru
      _
    // Predicated region
    $region6: #{tpu_custom_call.1} parent=1 // pred_check
      _
    $region7: #{tpu_custom_call.1} parent=1 // pred_check_branch
      %17 = sbr.rel (0) target = $region9
    $region8: #{tpu_custom_call.1} parent=1 // pred_region
      _
    $region9: #{tpu_custom_call.1} parent=1 // pred_fallthru
      _
    // Predicated region
    $region10: #{tpu_custom_call.1} parent=1 // pred_check
      _
    $region11: #{tpu_custom_call.1} parent=1 // pred_check_branch
      %19 = sbr.rel (0) target = $region13
    $region12: #{tpu_custom_call.1} parent=1 // pred_region
      _
    $region13: #{tpu_custom_call.1} parent=1 // pred_fallthru
      _
    // Predicated region
    $region14: #{tpu_custom_call.1} parent=1 // pred_check
      _
    $region15: #{tpu_custom_call.1} parent=1 // pred_check_branch
      %21 = sbr.rel (0) target = $region17
    $region16: #{tpu_custom_call.1} parent=1 // pred_region
      _
    $region17: #{tpu_custom_call.1} parent=1 // pred_fallthru
      _
    // Predicated region
    $region18: #{tpu_custom_call.1} parent=1 // pred_check
      _
    $region19: #{tpu_custom_call.1} parent=1 // pred_check_branch
      %23 = sbr.rel (0) target = $region21
    $region20: #{tpu_custom_call.1} parent=1 // pred_region
      _
    $region21: #{tpu_custom_call.1} parent=1 // pred_fallthru
      _
    // Predicated region
    $region22: #{tpu_custom_call.1} parent=1 // pred_check
      _
    $region23: #{tpu_custom_call.1} parent=1 // pred_check_branch
      %25 = sbr.rel (0) target = $region25
    $region24: #{tpu_custom_call.1} parent=1 // pred_region
      _
    $region25: #{tpu_custom_call.1} parent=1 // pred_fallthru
      _
    %v26 = vld [vmem:[%s0] sm:$0xf]
    %v27 = vld [vmem:[%s0 + $0x4] sm:$0xf]
    %v28 = vld [vmem:[%s0 + $0x8] sm:$0xf]
    %v29 = vld [vmem:[%s0 + $0xc] sm:$0xf]
    %v30 = vld [vmem:[%s0 + $0x10] sm:$0xf]
    %v31 = vld [vmem:[%s0 + $0x14] sm:$0xf]
    %v32 = vld [vmem:[%s0 + $0x18] sm:$0xf]
    %v33 = vld [vmem:[%s0 + $0x1c] sm:$0xf]
    %v34 = vld [vmem:[%s0 + $0x20] sm:$0xf]
    %v35 = vld [vmem:[%s0 + $0x24] sm:$0xf]
    %v36 = vld [vmem:[%s0 + $0x28] sm:$0xf]
    %v37 = vld [vmem:[%s0 + $0x2c] sm:$0xf]
    %v38 = vld [vmem:[%s0 + $0x30] sm:$0xf]
    %v39 = vld [vmem:[%s0 + $0x34] sm:$0xf]
    %v40 = vld [vmem:[%s0 + $0x38] sm:$0xf]
    %v41 = vld [vmem:[%s0 + $0x3c] sm:$0xf]
    %v42 = vld [vmem:[%s1] sm:$0xf]
    %v43 = vld [vmem:[%s1 + $0x4] sm:$0xf]
    %v44 = vld [vmem:[%s1 + $0x8] sm:$0xf]
    %v45 = vld [vmem:[%s1 + $0xc] sm:$0xf]
    %v46 = vld [vmem:[%s1 + $0x10] sm:$0xf]
    %v47 = vld [vmem:[%s1 + $0x14] sm:$0xf]
    %v48 = vld [vmem:[%s1 + $0x18] sm:$0xf]
    %v49 = vld [vmem:[%s1 + $0x1c] sm:$0xf]
    %v50 = vld [vmem:[%s1 + $0x20] sm:$0xf]
    %v51 = vld [vmem:[%s1 + $0x24] sm:$0xf]
    %v52 = vld [vmem:[%s1 + $0x28] sm:$0xf]
    %v53 = vld [vmem:[%s1 + $0x2c] sm:$0xf]
    %v54 = vld [vmem:[%s1 + $0x30] sm:$0xf]
    %v55 = vld [vmem:[%s1 + $0x34] sm:$0xf]
    %v56 = vld [vmem:[%s1 + $0x38] sm:$0xf]
    %v57 = vld [vmem:[%s1 + $0x3c] sm:$0xf]
    %v74 = vunpack.c.l.b16 %v42
    %v75 = vunpack.c.l.b16 %v43
    %v76 = vunpack.c.l.b16 %v44
    %v77 = vunpack.c.l.b16 %v45
    %v78 = vunpack.c.l.b16 %v46
    %v79 = vunpack.c.l.b16 %v47
    %v80 = vunpack.c.l.b16 %v48
    %v81 = vunpack.c.l.b16 %v49
    %v82 = vunpack.c.l.b16 %v50
    %v83 = vunpack.c.l.b16 %v51
    %v84 = vunpack.c.l.b16 %v52
    %v85 = vunpack.c.l.b16 %v53
    %v86 = vunpack.c.l.b16 %v54
    %v87 = vunpack.c.l.b16 %v55
    %v88 = vunpack.c.l.b16 %v56
    %v89 = vunpack.c.l.b16 %v57
    %v90 = vpack.c.b16 %v75, %v74
    %v91 = vpack.c.b16 %v77, %v76
    %v92 = vpack.c.b16 %v79, %v78
    %v93 = vpack.c.b16 %v81, %v80
    %v94 = vpack.c.b16 %v83, %v82
    %v95 = vpack.c.b16 %v85, %v84
    %v96 = vpack.c.b16 %v87, %v86
    %v97 = vpack.c.b16 %v89, %v88
    %v114 = vunpack.c.l.b16 %v26
    %v115 = vunpack.c.l.b16 %v27
    %v116 = vunpack.c.l.b16 %v28
    %v117 = vunpack.c.l.b16 %v29
    %v118 = vunpack.c.l.b16 %v30
    %v119 = vunpack.c.l.b16 %v31
    %v120 = vunpack.c.l.b16 %v32
    %v121 = vunpack.c.l.b16 %v33
    %v122 = vunpack.c.l.b16 %v34
    %v123 = vunpack.c.l.b16 %v35
    %v124 = vunpack.c.l.b16 %v36
    %v125 = vunpack.c.l.b16 %v37
    %v126 = vunpack.c.l.b16 %v38
    %v127 = vunpack.c.l.b16 %v39
    %v128 = vunpack.c.l.b16 %v40
    %v129 = vunpack.c.l.b16 %v41
    %v130 = vpack.c.b16 %v115, %v114
    %v131 = vpack.c.b16 %v117, %v116
    %v132 = vpack.c.b16 %v119, %v118
    %v133 = vpack.c.b16 %v121, %v120
    %v134 = vpack.c.b16 %v123, %v122
    %v135 = vpack.c.b16 %v125, %v124
    %v136 = vpack.c.b16 %v127, %v126
    %v137 = vpack.c.b16 %v129, %v128
    %vm138 = vcmask 64512
    %v140 = vsel %vm138, %v90, 0
    %v143 = vsel %vm138, %v91, 0
    %v146 = vsel %vm138, %v92, 0
    %v149 = vsel %vm138, %v93, 0
    %v152 = vsel %vm138, %v94, 0
    %v155 = vsel %vm138, %v95, 0
    %v158 = vsel %vm138, %v96, 0
    %v161 = vsel %vm138, %v97, 0
    %v164 = vsel %vm138, %v130, 0
    %v167 = vsel %vm138, %v131, 0
    %v170 = vsel %vm138, %v132, 0
    %v173 = vsel %vm138, %v133, 0
    %v176 = vsel %vm138, %v134, 0
    %v179 = vsel %vm138, %v135, 0
    %v182 = vsel %vm138, %v136, 0
    %v185 = vsel %vm138, %v137, 0
    %187 = vmatpush.bf16.xpose.msra.mxu0 %v185
    %188 = vmatpush.bf16.xpose.msra.mxu0 %v182
    %189 = vmatpush.bf16.xpose.msra.mxu0 %v179
    %190 = vmatpush.bf16.xpose.msra.mxu0 %v176
    %191 = vmatpush.bf16.xpose.msra.mxu0 %v173
    %192 = vmatpush.bf16.xpose.msra.mxu0 %v170
    %193 = vmatpush.bf16.xpose.msra.mxu0 %v167
    %194 = vmatpush.bf16.xpose.msra.mxu0 %v164
    %195 = vmatmul.bf16.gmra.mxu0 %v140
    %v196 = vpop.f32.mrf.mxu0
    %v197 = vadd.f32 0.0, %v196
    %v198 = vpop.f32.mrf.mxu0
    %v199 = vadd.f32 0.0, %v198
    %200 = vmatmul.bf16.gmra.mxu0 %v143
    %v201 = vpop.f32.mrf.mxu0
    %v202 = vadd.f32 0.0, %v201
    %v203 = vpop.f32.mrf.mxu0
    %v204 = vadd.f32 0.0, %v203
    %205 = vmatmul.bf16.gmra.mxu0 %v146
    %v206 = vpop.f32.mrf.mxu0
    %v207 = vadd.f32 0.0, %v206
    %v208 = vpop.f32.mrf.mxu0
    %v209 = vadd.f32 0.0, %v208
    %210 = vmatmul.bf16.gmra.mxu0 %v149
    %v211 = vpop.f32.mrf.mxu0
    %v212 = vadd.f32 0.0, %v211
    %v213 = vpop.f32.mrf.mxu0
    %v214 = vadd.f32 0.0, %v213
    %215 = vmatmul.bf16.gmra.mxu0 %v152
    %v216 = vpop.f32.mrf.mxu0
    %v217 = vadd.f32 0.0, %v216
    %v218 = vpop.f32.mrf.mxu0
    %v219 = vadd.f32 0.0, %v218
    %220 = vmatmul.bf16.gmra.mxu0 %v155
    %v221 = vpop.f32.mrf.mxu0
    %v222 = vadd.f32 0.0, %v221
    %v223 = vpop.f32.mrf.mxu0
    %v224 = vadd.f32 0.0, %v223
    %225 = vmatmul.bf16.gmra.mxu0 %v158
    %v226 = vpop.f32.mrf.mxu0
    %v227 = vadd.f32 0.0, %v226
    %v228 = vpop.f32.mrf.mxu0
    %v229 = vadd.f32 0.0, %v228
    %230 = vmatmul.bf16.gmra.mxu0 %v161
    %v231 = vpop.f32.mrf.mxu0
    %v232 = vadd.f32 0.0, %v231
    %v233 = vpop.f32.mrf.mxu0
    %v234 = vadd.f32 0.0, %v233
    %235 = vdwg.mxu0
    %v236 = vmax.f32 %v197, 0.0
    %v237 = vmax.f32 %v199, 0.0
    %v238 = vmax.f32 %v202, 0.0
    %v239 = vmax.f32 %v204, 0.0
    %v240 = vmax.f32 %v207, 0.0
    %v241 = vmax.f32 %v209, 0.0
    %v242 = vmax.f32 %v212, 0.0
    %v243 = vmax.f32 %v214, 0.0
    %v244 = vmax.f32 %v217, 0.0
    %v245 = vmax.f32 %v219, 0.0
    %v246 = vmax.f32 %v222, 0.0
    %v247 = vmax.f32 %v224, 0.0
    %v248 = vmax.f32 %v227, 0.0
    %v249 = vmax.f32 %v229, 0.0
    %v250 = vmax.f32 %v232, 0.0
    %v251 = vmax.f32 %v234, 0.0
    %v252 = vld [vmem:[%s2] sm:$0xf]
    %v253 = vld [vmem:[%s2 + $0x4] sm:$0xf]
    %v254 = vld [vmem:[%s2 + $0x8] sm:$0xf]
    %v255 = vld [vmem:[%s2 + $0xc] sm:$0xf]
    %v256 = vpack.c.bf16 %v237, %v236
    %v257 = vpack.c.bf16 %v239, %v238
    %v258 = vpack.c.bf16 %v241, %v240
    %v259 = vpack.c.bf16 %v243, %v242
    %v260 = vpack.c.bf16 %v245, %v244
    %v261 = vpack.c.bf16 %v247, %v246
    %v262 = vpack.c.bf16 %v249, %v248
    %v263 = vpack.c.bf16 %v251, %v250
    %v264 = vld [vmem:[%s3] sm:$0xff]
    %v265 = vld [vmem:[%s3 + $0x8] sm:$0xff]
    %v266 = vld [vmem:[%s3 + $0x10] sm:$0xff]
    %v267 = vld [vmem:[%s3 + $0x18] sm:$0xff]
    %269 = vset.pattern.permute.xlu0 0
    %270 = vperm.xlu0 %269, %v264
    %v271 = vpop.permute.xlu0 %270
    %274 = vset.pattern.permute.xlu0 0
    %275 = vperm.xlu0 %274, %v265
    %v276 = vpop.permute.xlu0 %275
    %279 = vset.pattern.permute.xlu0 0
    %280 = vperm.xlu0 %279, %v266
    %v281 = vpop.permute.xlu0 %280
    %284 = vset.pattern.permute.xlu0 0
    %285 = vperm.xlu0 %284, %v267
    %v286 = vpop.permute.xlu0 %285
    %v292 = vunpack.c.l.b16 %v252
    %v293 = vunpack.c.l.b16 %v253
    %v294 = vunpack.c.l.b16 %v254
    %v295 = vunpack.c.l.b16 %v255
    %v296 = vpack.c.b16 %v293, %v292
    %v297 = vpack.c.b16 %v295, %v294
    %300 = vmatpush.bf16.msra.mxu0 %v263
    %301 = vmatpush.bf16.msra.mxu0 %v262
    %302 = vmatpush.bf16.msra.mxu0 %v261
    %303 = vmatpush.bf16.msra.mxu0 %v260
    %304 = vmatpush.bf16.msra.mxu0 %v259
    %305 = vmatpush.bf16.msra.mxu0 %v258
    %306 = vmatpush.bf16.msra.mxu0 %v257
    %307 = vmatpush.bf16.msra.mxu0 %v256
    %308 = vmatmul.bf16.gmra.mxu0 %v296
    %v309 = vpop.f32.mrf.mxu0
    %v310 = vadd.f32 %v271, %v309
    %v311 = vpop.f32.mrf.mxu0
    %v312 = vadd.f32 %v276, %v311
    %313 = vmatmul.bf16.gmra.mxu0 %v297
    %v314 = vpop.f32.mrf.mxu0
    %v315 = vadd.f32 %v281, %v314
    %v316 = vpop.f32.mrf.mxu0
    %v317 = vadd.f32 %v286, %v316
    %318 = vdwg.mxu0
    %v319 = vmax.f32 %v310, 0.0
    %v320 = vmax.f32 %v312, 0.0
    %v321 = vmax.f32 %v315, 0.0
    %v322 = vmax.f32 %v317, 0.0
    %v323 = vld [vmem:[%s4] sm:$0xff]
    %v324 = vld [vmem:[%s4 + $0x8] sm:$0xff]
    %v325 = vld [vmem:[%s4 + $0x10] sm:$0xff]
    %v326 = vld [vmem:[%s4 + $0x18] sm:$0xff]
    %328 = vset.pattern.permute.xlu0 0
    %329 = vperm.xlu0 %328, %v323
    %v330 = vpop.permute.xlu0 %329
    %333 = vset.pattern.permute.xlu0 0
    %334 = vperm.xlu0 %333, %v324
    %v335 = vpop.permute.xlu0 %334
    %338 = vset.pattern.permute.xlu0 0
    %339 = vperm.xlu0 %338, %v325
    %v340 = vpop.permute.xlu0 %339
    %343 = vset.pattern.permute.xlu0 0
    %344 = vperm.xlu0 %343, %v326
    %v345 = vpop.permute.xlu0 %344
    %v347 = vmul.f32 %v319, %v330
    %v348 = vmul.f32 %v320, %v335
    %v349 = vmul.f32 %v321, %v340
    %v350 = vmul.f32 %v322, %v345
    %v351 = vadd.f32 %v347, %v348
    %v352 = vadd.f32 %v351, %v349
    %v353 = vadd.f32 %v352, %v350
    %v354 = vrot.slane %v353, 4
    %v355 = vadd.f32 %v353, %v354
    %v356 = vrot.slane %v355, 2
    %v357 = vadd.f32 %v355, %v356
    %v358 = vrot.slane %v357, 1
    %v359 = vadd.f32 %v357, %v358
    %v360 = vld [vmem:[#allocation2] sm:$0x1]
    %362 = vset.pattern.permute.xlu0 0
    %363 = vperm.xlu0 %362, %v360
    %v364 = vpop.permute.xlu0 %363
    %v366 = vperm.slane %v364, 0
    %v367 = vadd.f32 %v359, %v366
    %v368 = vsub.f32 0.0, %v367
    %v369 = vmul.f32 %v368, 1.442695
    %v370 = vpow.pop %v369
    %v371 = vadd.f32 %v370, 1.0
    %v372 = vrcp.pop %v371
    %373 = vst [vmem:[#allocation3] sm:$0x1] %v372
    // Predicated region
    $region26: #{tpu_custom_call.1} parent=1 // pred_check
      _
    $region27: #{tpu_custom_call.1} parent=1 // pred_check_branch
      %375 = sbr.rel (0) target = $region29
    $region28: #{tpu_custom_call.1} parent=1 // pred_region
      %377 = vsyncadd [#allocation4], 0
      %s379 = sshll.u32 [#allocation3], 4
      %s380 = int_to_ptr.vmem [resolvable:$true] %s379
      %s381 = sshll.u32 %s6, 4
      %s382 = int_to_ptr.hbm [resolvable:$true] %s381
      %384 = dma.vmem_to_hbm [thread:$0]  %s380, 16, %s382, [#allocation4]
    $region29: #{tpu_custom_call.1} parent=1 // pred_fallthru
      _
    // Predicated region
    $region30: #{tpu_custom_call.1} parent=1 // pred_check
      _
    $region31: #{tpu_custom_call.1} parent=1 // pred_check_branch
      %386 = sbr.rel (0) target = $region33
    $region32: #{tpu_custom_call.1} parent=1 // pred_region
      %388 = dma.done [#allocation4], 16
    $region33: #{tpu_custom_call.1} parent=1 // pred_fallthru
      _
    %389 = vsyncpa [#allocation4], 1

</llo_original>
